<compile_context>
chip_gen: v7x
topology: tpu7x:2x2x1
jax: 0.10.0
libtpu: 0.0.40
codegen_flags: <defaults>
</compile_context>

<pallas_src>
import jax
import jax.numpy as jnp
from jax.experimental import pallas as pl
from jax.experimental.pallas import tpu as pltpu


def _round_up(x: int, m: int) -> int:
    return ((x + m - 1) // m) * m


def _node_graph_attn_kernel(g_ref, n_ref, wg_ref, bg_ref, wn_ref, bn_ref,
                            rep_ref, seg_ref, o_ref):
    # g_ref  : (TB, G)        graph-feature slab
    # n_ref  : (TB, ND_pad)   node features, (N, D) minor dims flattened lane-dense
    # wg_ref : (G, H)         graph_linear weight, transposed to (in, out)
    # bg_ref : (1, H)         graph_linear bias
    # wn_ref : (H, D)         node_linear weight, PyTorch (out, in) layout
    # bn_ref : (1, H)         node_linear bias
    # rep_ref: (D, ND_pad)    0/1 replication matrix: rep[d, n*D + d] = 1
    # seg_ref: (ND_pad, N)    0/1 segment-sum matrix: seg[n*D + d, n] = 1
    # o_ref  : (TB, N)        scores

    # graph_linear: (TB, G) @ (G, H) + (1, H) -> (TB, H)            [MXU]
    gh = jnp.dot(g_ref[...], wg_ref[...],
                 preferred_element_type=jnp.float32) + bg_ref[...]

    # Exact algebraic refactor of node_linear + bmm:
    #   scores[b, n] = sum_d n[b, n, d] * v[b, d] + gh[b, :] . bn
    #   with v = gh @ Wn   (Wn is (H, D))
    v = jnp.dot(gh, wn_ref[...], preferred_element_type=jnp.float32)      # (TB, D)   [MXU]
    bias = jnp.sum(gh * bn_ref[...], axis=-1, keepdims=True)              # (TB, 1)   [VPU+XLU]

    # Replicate v across the N node segments of the flat lane axis            [MXU]
    v_rep = jnp.dot(v, rep_ref[...], preferred_element_type=jnp.float32)  # (TB, ND_pad)
    # Lane-dense elementwise product                                          [VPU]
    y = n_ref[...] * v_rep                                                # (TB, ND_pad)
    # Segment-sum the D lanes of each node                                    [MXU]
    scores = jnp.dot(y, seg_ref[...],
                     preferred_element_type=jnp.float32) + bias           # (TB, N)

    o_ref[...] = scores.astype(o_ref.dtype)


def _vmem_limit_bytes() -> int:
    """Explicit scoped-VMEM limit: ~48 MiB on v7x, ~96 MiB on v5e/v6e."""
    cap = 64 * 1024 * 1024  # conservative fallback (v7x per-TC physical VMEM)
    try:
        info = pltpu.get_tpu_info()
        c = getattr(info, "vmem_capacity_bytes", None)
        if c:
            cap = int(c)
    except Exception:
        pass
    return int(cap * 3 // 4)  # leave ~25% headroom for compiler scratch / spills


def _choose_block_b(B: int, G: int, N: int, D: int, ND_pad: int, H: int,
                    vmem_limit: int) -> int:
    """Pick the per-step batch block: as large as the VMEM budget allows."""
    # Padded-VMEM bytes per batch row (f32, last dim rounded up to 128 lanes).
    # The n / g / out blocks are double-buffered by the pipeline; gh, v,
    # v_rep and y are kernel intermediates.
    per_row = 4 * (2 * ND_pad                  # n_feats block (x2 buffers)
                   + 2 * _round_up(G, 128)     # g_feats block (x2 buffers)
                   + 2 * _round_up(N, 128)     # output block (x2 buffers)
                   + 2 * ND_pad                # v_rep + y intermediates
                   + _round_up(H, 128)         # gh intermediate
                   + _round_up(D, 128))        # v intermediate
    budget = int(vmem_limit * 0.8)             # headroom under the scoped limit
    tb = max(8, (budget // per_row) // 8 * 8)
    tb = min(tb, 8192)                         # ~1-4 MiB of n_feats per step
    if B <= tb:
        if B >= 1024:
            # Keep >= 2 grid blocks so both v7x TensorCores are fed.
            tb = max(8, _round_up(pl.cdiv(B, 2), 8))
        else:
            tb = B                             # single block, no padding
    return tb


def node_graph_attn(g_feats, n_feats, wg_t, bg, wn, bn, *, block_b=None):
    """
    g_feats: (B, G) f32
    n_feats: (B, N, D) f32
    wg_t:    (G, H) f32   graph_linear weight, transposed to (in, out)
    bg:      (1, H) f32   graph_linear bias
    wn:      (H, D) f32   node_linear weight, PyTorch (out, in) layout
    bn:      (1, H) f32   node_linear bias
    returns: (B, N) f32
    """
    B, G = g_feats.shape
    _, N, D = n_feats.shape
    H = wg_t.shape[1]
    ND = N * D
    ND_pad = _round_up(ND, 128)

    # Flatten (N, D) into a single lane-dense axis (row-major, zero-cost in HBM),
    # padding the fused axis to a multiple of 128 lanes if needed.
    n_flat = n_feats.reshape(B, ND)
    if ND_pad != ND:
        n_flat = jnp.pad(n_flat, ((0, 0), (0, ND_pad - ND)))

    vmem_limit = _vmem_limit_bytes()
    if block_b is None:
        block_b = _choose_block_b(B, G, N, D, ND_pad, H, vmem_limit)
    num_blocks = pl.cdiv(B, block_b)
    B_pad = num_blocks * block_b
    if B_pad != B:
        g_feats = jnp.pad(g_feats, ((0, B_pad - B), (0, 0)))
        n_flat = jnp.pad(n_flat, ((0, B_pad - B), (0, 0)))

    # Constant 0/1 helper matrices (tiny; resident in VMEM, fetched once):
    #   rep[d, n*D + d] = 1   replicates v across the N node segments
    #   seg[n*D + d, n] = 1   segment-sums the D lanes of each node
    j = jnp.arange(ND_pad)
    rep_mat = ((j[None, :] < ND)
               & ((j[None, :] % D) == jnp.arange(D)[:, None])).astype(jnp.float32)
    seg_mat = ((j[:, None] < ND)
               & ((j[:, None] // D) == jnp.arange(N)[None, :])).astype(jnp.float32)

    out = pl.pallas_call(
        _node_graph_attn_kernel,
        out_shape=jax.ShapeDtypeStruct((B_pad, N), jnp.float32),
        grid_spec=pltpu.PrefetchScalarGridSpec(
            num_scalar_prefetch=0,
            grid=(num_blocks,),
            in_specs=[
                pl.BlockSpec((block_b, G), lambda b: (b, 0)),       # g_feats block
                pl.BlockSpec((block_b, ND_pad), lambda b: (b, 0)),  # flat n_feats block
                pl.BlockSpec((G, H), lambda b: (0, 0)),             # graph weight (resident)
                pl.BlockSpec((1, H), lambda b: (0, 0)),             # graph bias
                pl.BlockSpec((H, D), lambda b: (0, 0)),             # node weight (resident)
                pl.BlockSpec((1, H), lambda b: (0, 0)),             # node bias
                pl.BlockSpec((D, ND_pad), lambda b: (0, 0)),        # replication matrix
                pl.BlockSpec((ND_pad, N), lambda b: (0, 0)),        # segment-sum matrix
            ],
            out_specs=pl.BlockSpec((block_b, N), lambda b: (b, 0)),
        ),
        compiler_params=pltpu.CompilerParams(
            dimension_semantics=("parallel",),
            vmem_limit_bytes=vmem_limit,
        ),
    )(g_feats, n_flat, wg_t, bg, wn, bn, rep_mat, seg_mat)

    if B_pad != B:
        out = out[:B]
    return out


def node_graph_attn_ref(g_feats, n_feats, wg_t, bg, wn, bn):
    gh = g_feats @ wg_t + bg                              # (B, H)
    nh = jnp.einsum("bnd,hd->bnh", n_feats, wn) + bn      # (B, N, H)
    return jnp.einsum("bnh,bh->bn", nh, gh)               # (B, N)


if __name__ == "__main__":
    # Small shapes consistent with the module's forward.
    N = 8              # num_nodes
    NODE_DIM = 16      # node_embed_dim
    GRAPH_DIM = 32     # graph_embed_dim
    HIDDEN = 32        # hidden_size

    key = jax.random.PRNGKey(0)
    (k_g, k_n, k_wg, k_bg, k_wn, k_bn,
     k_g2, k_n2, k_g3, k_n3) = jax.random.split(key, 10)

    # Parameters (PyTorch Linear stores W as (out, in); graph weight is passed
    # transposed (in, out), node weight in its natural (out, in) layout).
    wg_t = jax.random.normal(k_wg, (GRAPH_DIM, HIDDEN), dtype=jnp.float32) * 0.1
    bg = jax.random.normal(k_bg, (1, HIDDEN), dtype=jnp.float32) * 0.1
    wn = jax.random.normal(k_wn, (HIDDEN, NODE_DIM), dtype=jnp.float32) * 0.1
    bn = jax.random.normal(k_bn, (1, HIDDEN), dtype=jnp.float32) * 0.1

    # Case 1: tiny batch (single grid step).
    B = 2
    g_feats = jax.random.normal(k_g, (B, GRAPH_DIM), dtype=jnp.float32)
    n_feats = jax.random.normal(k_n, (B, N, NODE_DIM), dtype=jnp.float32)
    out = jax.block_until_ready(node_graph_attn(g_feats, n_feats, wg_t, bg, wn, bn))
    ref = node_graph_attn_ref(g_feats, n_feats, wg_t, bg, wn, bn)
    assert out.shape == (B, N), out.shape
    assert jnp.allclose(out, ref, atol=2e-3, rtol=2e-3), (out, ref)

    # Case 2: batch not a multiple of 8 (single block equal to full batch).
    B2 = 20
    g_feats2 = jax.random.normal(k_g2, (B2, GRAPH_DIM), dtype=jnp.float32)
    n_feats2 = jax.random.normal(k_n2, (B2, N, NODE_DIM), dtype=jnp.float32)
    out2 = jax.block_until_ready(node_graph_attn(g_feats2, n_feats2, wg_t, bg, wn, bn))
    ref2 = node_graph_attn_ref(g_feats2, n_feats2, wg_t, bg, wn, bn)
    assert out2.shape == (B2, N), out2.shape
    assert jnp.allclose(out2, ref2, atol=2e-3, rtol=2e-3), (out2, ref2)

    # Case 3: forced small block to exercise multi-block grid + batch padding.
    B3 = 300
    g_feats3 = jax.random.normal(k_g3, (B3, GRAPH_DIM), dtype=jnp.float32)
    n_feats3 = jax.random.normal(k_n3, (B3, N, NODE_DIM), dtype=jnp.float32)
    out3 = jax.block_until_ready(
        node_graph_attn(g_feats3, n_feats3, wg_t, bg, wn, bn, block_b=128))
    ref3 = node_graph_attn_ref(g_feats3, n_feats3, wg_t, bg, wn, bn)
    assert out3.shape == (B3, N), out3.shape
    assert jnp.allclose(out3, ref3, atol=2e-3, rtol=2e-3), (out3, ref3)

    print("KERNEL_OK")
</pallas_src>

<mosaic_0001>
module attributes {stable_mosaic.version = 11 : i64} {
  func.func @_node_graph_attn_kernel(%arg0: i32, %arg1: memref<2x32xf32, #tpu.memory_space<vmem>>, %arg2: memref<2x128xf32, #tpu.memory_space<vmem>>, %arg3: memref<32x32xf32, #tpu.memory_space<vmem>>, %arg4: memref<1x32xf32, #tpu.memory_space<vmem>>, %arg5: memref<32x16xf32, #tpu.memory_space<vmem>>, %arg6: memref<1x32xf32, #tpu.memory_space<vmem>>, %arg7: memref<16x128xf32, #tpu.memory_space<vmem>>, %arg8: memref<128x8xf32, #tpu.memory_space<vmem>>, %arg9: memref<2x8xf32, #tpu.memory_space<vmem>>) attributes {dimension_semantics = [#tpu.dimension_semantics<parallel>], iteration_bounds = array<i64: 1>, scalar_prefetch = 0 : i64, scratch_operands = 0 : i64, tpu.core_type = #tpu.core_type<tc>, window_params = [{transform_indices = @transform_0, window_bounds = array<i64: 2, 32>}, {transform_indices = @transform_1, window_bounds = array<i64: 2, 128>}, {pipeline_mode = #tpu.pipeline_mode<synchronous>, transform_indices = @transform_2, window_bounds = array<i64: 32, 32>}, {pipeline_mode = #tpu.pipeline_mode<synchronous>, transform_indices = @transform_3, window_bounds = array<i64: 1, 32>}, {pipeline_mode = #tpu.pipeline_mode<synchronous>, transform_indices = @transform_4, window_bounds = array<i64: 32, 16>}, {pipeline_mode = #tpu.pipeline_mode<synchronous>, transform_indices = @transform_5, window_bounds = array<i64: 1, 32>}, {pipeline_mode = #tpu.pipeline_mode<synchronous>, transform_indices = @transform_6, window_bounds = array<i64: 16, 128>}, {pipeline_mode = #tpu.pipeline_mode<synchronous>, transform_indices = @transform_7, window_bounds = array<i64: 128, 8>}, {transform_indices = @transform_8, window_bounds = array<i64: 2, 8>}]} {
    %c0 = arith.constant 0 : index
    %c0_0 = arith.constant 0 : index
    %0 = vector.load %arg1[%c0, %c0_0] : memref<2x32xf32, #tpu.memory_space<vmem>>, vector<2x32xf32>
    %c0_1 = arith.constant 0 : index
    %c0_2 = arith.constant 0 : index
    %1 = vector.load %arg3[%c0_1, %c0_2] : memref<32x32xf32, #tpu.memory_space<vmem>>, vector<32x32xf32>
    %cst = arith.constant dense<0.000000e+00> : vector<2x32xf32>
    %2 = tpu.matmul %0, %1, %cst {dimension_numbers = #tpu.dot_dimension_numbers<[1], [0], [0], [1], [0, 0, 1, 1], [], []>} : vector<2x32xf32>, vector<32x32xf32>, vector<2x32xf32> -> vector<2x32xf32>
    %c0_3 = arith.constant 0 : index
    %c0_4 = arith.constant 0 : index
    %3 = vector.load %arg4[%c0_3, %c0_4] : memref<1x32xf32, #tpu.memory_space<vmem>>, vector<1x32xf32>
    %4 = vector.broadcast %3 : vector<1x32xf32> to vector<2x32xf32>
    %5 = arith.addf %2, %4 : vector<2x32xf32>
    %c0_5 = arith.constant 0 : index
    %c0_6 = arith.constant 0 : index
    %6 = vector.load %arg5[%c0_5, %c0_6] : memref<32x16xf32, #tpu.memory_space<vmem>>, vector<32x16xf32>
    %cst_7 = arith.constant dense<0.000000e+00> : vector<2x16xf32>
    %7 = tpu.matmul %5, %6, %cst_7 {dimension_numbers = #tpu.dot_dimension_numbers<[1], [0], [0], [1], [0, 0, 1, 1], [], []>} : vector<2x32xf32>, vector<32x16xf32>, vector<2x16xf32> -> vector<2x16xf32>
    %c0_8 = arith.constant 0 : index
    %c0_9 = arith.constant 0 : index
    %8 = vector.load %arg6[%c0_8, %c0_9] : memref<1x32xf32, #tpu.memory_space<vmem>>, vector<1x32xf32>
    %9 = vector.broadcast %8 : vector<1x32xf32> to vector<2x32xf32>
    %10 = arith.mulf %5, %9 : vector<2x32xf32>
    %cst_10 = arith.constant dense<0.000000e+00> : vector<2xf32>
    %11 = vector.multi_reduction <add>, %10, %cst_10 [1] : vector<2x32xf32> to vector<2xf32>
    %12 = vector.shape_cast %11 : vector<2xf32> to vector<2x1xf32>
    %c0_11 = arith.constant 0 : index
    %c0_12 = arith.constant 0 : index
    %13 = vector.load %arg7[%c0_11, %c0_12] : memref<16x128xf32, #tpu.memory_space<vmem>>, vector<16x128xf32>
    %cst_13 = arith.constant dense<0.000000e+00> : vector<2x128xf32>
    %14 = tpu.matmul %7, %13, %cst_13 {dimension_numbers = #tpu.dot_dimension_numbers<[1], [0], [0], [1], [0, 0, 1, 1], [], []>} : vector<2x16xf32>, vector<16x128xf32>, vector<2x128xf32> -> vector<2x128xf32>
    %c0_14 = arith.constant 0 : index
    %c0_15 = arith.constant 0 : index
    %15 = vector.load %arg2[%c0_14, %c0_15] : memref<2x128xf32, #tpu.memory_space<vmem>>, vector<2x128xf32>
    %16 = arith.mulf %15, %14 : vector<2x128xf32>
    %c0_16 = arith.constant 0 : index
    %c0_17 = arith.constant 0 : index
    %17 = vector.load %arg8[%c0_16, %c0_17] : memref<128x8xf32, #tpu.memory_space<vmem>>, vector<128x8xf32>
    %cst_18 = arith.constant dense<0.000000e+00> : vector<2x8xf32>
    %18 = tpu.matmul %16, %17, %cst_18 {dimension_numbers = #tpu.dot_dimension_numbers<[1], [0], [0], [1], [0, 0, 1, 1], [], []>} : vector<2x128xf32>, vector<128x8xf32>, vector<2x8xf32> -> vector<2x8xf32>
    %19 = vector.broadcast %12 : vector<2x1xf32> to vector<2x8xf32>
    %20 = arith.addf %18, %19 : vector<2x8xf32>
    %c0_19 = arith.constant 0 : index
    %c0_20 = arith.constant 0 : index
    %21 = vector.load %arg9[%c0_19, %c0_20] : memref<2x8xf32, #tpu.memory_space<vmem>>, vector<2x8xf32>
    tpu.vector_store %arg9[%c0_19, %c0_20], %20 {strides = array<i32>} : memref<2x8xf32, #tpu.memory_space<vmem>>, vector<2x8xf32>,
    return
  }
  func.func @transform_0(%arg0: i32) -> (i32, i32) {
    %c0_i32 = arith.constant 0 : i32
    %c0_i32_0 = arith.constant 0 : i32
    return %arg0, %c0_i32 : i32, i32
  }
  func.func @transform_1(%arg0: i32) -> (i32, i32) {
    %c0_i32 = arith.constant 0 : i32
    %c0_i32_0 = arith.constant 0 : i32
    return %arg0, %c0_i32 : i32, i32
  }
  func.func @transform_2(%arg0: i32) -> (i32, i32) {
    %c0_i32 = arith.constant 0 : i32
    %c0_i32_0 = arith.constant 0 : i32
    %c0_i32_1 = arith.constant 0 : i32
    return %c0_i32, %c0_i32_0 : i32, i32
  }
  func.func @transform_3(%arg0: i32) -> (i32, i32) {
    %c0_i32 = arith.constant 0 : i32
    %c0_i32_0 = arith.constant 0 : i32
    %c0_i32_1 = arith.constant 0 : i32
    return %c0_i32, %c0_i32_0 : i32, i32
  }
  func.func @transform_4(%arg0: i32) -> (i32, i32) {
    %c0_i32 = arith.constant 0 : i32
    %c0_i32_0 = arith.constant 0 : i32
    %c0_i32_1 = arith.constant 0 : i32
    return %c0_i32, %c0_i32_0 : i32, i32
  }
  func.func @transform_5(%arg0: i32) -> (i32, i32) {
    %c0_i32 = arith.constant 0 : i32
    %c0_i32_0 = arith.constant 0 : i32
    %c0_i32_1 = arith.constant 0 : i32
    return %c0_i32, %c0_i32_0 : i32, i32
  }
  func.func @transform_6(%arg0: i32) -> (i32, i32) {
    %c0_i32 = arith.constant 0 : i32
    %c0_i32_0 = arith.constant 0 : i32
    %c0_i32_1 = arith.constant 0 : i32
    return %c0_i32, %c0_i32_0 : i32, i32
  }
  func.func @transform_7(%arg0: i32) -> (i32, i32) {
    %c0_i32 = arith.constant 0 : i32
    %c0_i32_0 = arith.constant 0 : i32
    %c0_i32_1 = arith.constant 0 : i32
    return %c0_i32, %c0_i32_0 : i32, i32
  }
  func.func @transform_8(%arg0: i32) -> (i32, i32) {
    %c0_i32 = arith.constant 0 : i32
    %c0_i32_0 = arith.constant 0 : i32
    return %arg0, %c0_i32 : i32, i32
  }
}

</mosaic_0001>

<llo_original>
// kernel: tpu_custom_call.1
$region0: #{tpu_custom_call.1}
  #allocation0 [shape = 'u32[]', space=smem, size = 0x4, offset = 0x4, fixed_abs, tag = 'smem constant byte address 0x4 - core index']
  #allocation1 [shape = 'u32[144,128]{1,0:T(1,128)}', space=vmem, size = 0x12000, scoped, tag = 'internal scratch']
  %s0 = inlined_call_operand.vmem [shape: f32[2,32], index: 0, kind: input, shape index: {}]
  %s1 = inlined_call_operand.vmem [shape: f32[2,128], index: 1, kind: input, shape index: {}]
  %s2 = inlined_call_operand.vmem [shape: f32[32,32], index: 2, kind: input, shape index: {}]
  %s3 = inlined_call_operand.vmem [shape: f32[1,32], index: 3, kind: input, shape index: {}]
  %s4 = inlined_call_operand.vmem [shape: f32[32,16], index: 4, kind: input, shape index: {}]
  %s5 = inlined_call_operand.vmem [shape: f32[1,32], index: 5, kind: input, shape index: {}]
  %s6 = inlined_call_operand.vmem [shape: f32[16,128], index: 6, kind: input, shape index: {}]
  %s7 = inlined_call_operand.vmem [shape: f32[128,8], index: 7, kind: input, shape index: {}]
  %s8 = inlined_call_operand.hbm [shape: f32[2,8], index: 8, kind: output, shape index: {}]
  %s9 = sld [smem:[#allocation0]]
  $region42: #{tpu_custom_call.1} parent=0
    _
  %s11 = ssub.s32 1, %s9
  %s12 = scalar_select 0, %s11, %s9
  $region1: #{tpu_custom_call.1} parent=0
    #allocation2 [shape = 'u8[1024]{0}', space=vmem, size = 0x400, scoped, tag = 'output window, operand 0, single buffered']
    #allocation3 [shape = 's32[1]{0}', space=sflag, size = 0x4, scoped, tag = 'scoped memory for tpu_custom_call.1']
    %13 = vsyncpa [#allocation3], 0
    // Predicated region
    $region2: #{tpu_custom_call.1} parent=1 // pred_check
      _
    $region3: #{tpu_custom_call.1} parent=1 // pred_check_branch
      %15 = sbr.rel (0) target = $region5
    $region4: #{tpu_custom_call.1} parent=1 // pred_region
      _
    $region5: #{tpu_custom_call.1} parent=1 // pred_fallthru
      _
    // Predicated region
    $region6: #{tpu_custom_call.1} parent=1 // pred_check
      _
    $region7: #{tpu_custom_call.1} parent=1 // pred_check_branch
      %17 = sbr.rel (0) target = $region9
    $region8: #{tpu_custom_call.1} parent=1 // pred_region
      _
    $region9: #{tpu_custom_call.1} parent=1 // pred_fallthru
      _
    // Predicated region
    $region10: #{tpu_custom_call.1} parent=1 // pred_check
      _
    $region11: #{tpu_custom_call.1} parent=1 // pred_check_branch
      %19 = sbr.rel (0) target = $region13
    $region12: #{tpu_custom_call.1} parent=1 // pred_region
      _
    $region13: #{tpu_custom_call.1} parent=1 // pred_fallthru
      _
    // Predicated region
    $region14: #{tpu_custom_call.1} parent=1 // pred_check
      _
    $region15: #{tpu_custom_call.1} parent=1 // pred_check_branch
      %21 = sbr.rel (0) target = $region17
    $region16: #{tpu_custom_call.1} parent=1 // pred_region
      _
    $region17: #{tpu_custom_call.1} parent=1 // pred_fallthru
      _
    // Predicated region
    $region18: #{tpu_custom_call.1} parent=1 // pred_check
      _
    $region19: #{tpu_custom_call.1} parent=1 // pred_check_branch
      %23 = sbr.rel (0) target = $region21
    $region20: #{tpu_custom_call.1} parent=1 // pred_region
      _
    $region21: #{tpu_custom_call.1} parent=1 // pred_fallthru
      _
    // Predicated region
    $region22: #{tpu_custom_call.1} parent=1 // pred_check
      _
    $region23: #{tpu_custom_call.1} parent=1 // pred_check_branch
      %25 = sbr.rel (0) target = $region25
    $region24: #{tpu_custom_call.1} parent=1 // pred_region
      _
    $region25: #{tpu_custom_call.1} parent=1 // pred_fallthru
      _
    // Predicated region
    $region26: #{tpu_custom_call.1} parent=1 // pred_check
      _
    $region27: #{tpu_custom_call.1} parent=1 // pred_check_branch
      %27 = sbr.rel (0) target = $region29
    $region28: #{tpu_custom_call.1} parent=1 // pred_region
      _
    $region29: #{tpu_custom_call.1} parent=1 // pred_fallthru
      _
    // Predicated region
    $region30: #{tpu_custom_call.1} parent=1 // pred_check
      _
    $region31: #{tpu_custom_call.1} parent=1 // pred_check_branch
      %29 = sbr.rel (0) target = $region33
    $region32: #{tpu_custom_call.1} parent=1 // pred_region
      _
    $region33: #{tpu_custom_call.1} parent=1 // pred_fallthru
      _
    %v30 = vld [vmem:[%s0] sm:$0x3]
    %v31 = vld [vmem:[%s2] sm:$0xff]
    %v32 = vld [vmem:[%s2 + $0x8] sm:$0xff]
    %v33 = vld [vmem:[%s2 + $0x10] sm:$0xff]
    %v34 = vld [vmem:[%s2 + $0x18] sm:$0xff]
    %v35 = vld [vmem:[%s3] sm:$0x1]
    %v37 = vlaneseq
    %v38 = vshrl.u32 %v37, 7
    %v39 = vsub.s32 0, %v38
    %v40 = vrot.slane %v35, %v39
    %vm42 = vcmask 261120
    %v44 = vsel %vm42, %v30, 0
    %46 = vmatprep.subr.mxu0 0.0
    %47 = vmatpush1.msra.mxu0 %v31
    %48 = vmatprep.subr.mxu0 0.0
    %49 = vmatpush1.msra.mxu0 %v32
    %50 = vmatprep.subr.mxu0 0.0
    %51 = vmatpush1.msra.mxu0 %v33
    %52 = vmatprep.subr.mxu0 0.0
    %53 = vmatpush1.msra.mxu0 %v34
    %54 = vmatprep.subr.mxu0 0.0
    %55 = vmatpush1.msra.mxu0 0.0
    %56 = vmatprep.subr.mxu0 0.0
    %57 = vmatpush1.msra.mxu0 0.0
    %58 = vmatprep.subr.mxu0 0.0
    %59 = vmatpush1.msra.mxu0 0.0
    %60 = vmatprep.subr.mxu0 0.0
    %61 = vmatpush1.msra.mxu0 0.0
    %62 = vmatprep.subr.mxu0 0.0
    %63 = vmatpush1.msra.mxu0 0.0
    %64 = vmatprep.subr.mxu0 0.0
    %65 = vmatpush1.msra.mxu0 0.0
    %66 = vmatprep.subr.mxu0 0.0
    %67 = vmatpush1.msra.mxu0 0.0
    %68 = vmatprep.subr.mxu0 0.0
    %69 = vmatpush1.msra.mxu0 0.0
    %70 = vmatprep.subr.mxu0 0.0
    %71 = vmatpush1.msra.mxu0 0.0
    %72 = vmatprep.subr.mxu0 0.0
    %73 = vmatpush1.msra.mxu0 0.0
    %74 = vmatprep.subr.mxu0 0.0
    %75 = vmatpush1.msra.mxu0 0.0
    %76 = vmatprep.subr.mxu0 0.0
    %77 = vmatpush1.msra.mxu0 0.0
    %78 = vmatprep.subr.mxu0 0.0
    %79 = vmatpush1.msra.mxu0 0.0
    %80 = vmatprep.subr.mxu0 0.0
    %81 = vmatpush1.msra.mxu0 0.0
    %82 = vmatprep.subr.mxu0 0.0
    %83 = vmatpush1.msra.mxu0 0.0
    %84 = vmatprep.subr.mxu0 0.0
    %85 = vmatpush1.msra.mxu0 0.0
    %86 = vmatprep.subr.mxu0 0.0
    %87 = vmatpush1.msra.mxu0 0.0
    %88 = vmatprep.subr.mxu0 0.0
    %89 = vmatpush1.msra.mxu0 0.0
    %90 = vmatprep.subr.mxu0 0.0
    %91 = vmatpush1.msra.mxu0 0.0
    %92 = vmatprep.subr.mxu0 0.0
    %93 = vmatpush1.msra.mxu0 0.0
    %94 = vmatprep.subr.mxu0 0.0
    %95 = vmatpush1.msra.mxu0 0.0
    %96 = vmatprep.subr.mxu0 0.0
    %97 = vmatpush1.msra.mxu0 0.0
    %98 = vmatprep.subr.mxu0 0.0
    %99 = vmatpush1.msra.mxu0 0.0
    %100 = vmatprep.subr.mxu0 0.0
    %101 = vmatpush1.msra.mxu0 0.0
    %102 = vmatprep.subr.mxu0 0.0
    %103 = vmatpush1.msra.mxu0 0.0
    %104 = vmatprep.subr.mxu0 0.0
    %105 = vmatpush1.msra.mxu0 0.0
    %106 = vmatprep.subr.mxu0 0.0
    %107 = vmatpush1.msra.mxu0 0.0
    %108 = vmatprep.subr.mxu0 0.0
    %109 = vmatpush1.msra.mxu0 0.0
    %110 = vmatprep.mubr.f32.mxu0 0.0
    %111 = vmatmul.mubr.f32.gmra.mrb[0].mxu0 %v44
    %v112 = vpop.f32.mrb[0].mxu0
    %v113 = vadd.f32 %v40, %v112
    %v114 = vpop.f32.mrb[0].mxu0
    %115 = vdwg.mxu0
    %v116 = vld [vmem:[%s4] sm:$0xff]
    %v117 = vld [vmem:[%s4 + $0x8] sm:$0xff]
    %v118 = vld [vmem:[%s4 + $0x10] sm:$0xff]
    %v119 = vld [vmem:[%s4 + $0x18] sm:$0xff]
    %v121 = vsel %vm42, %v113, 0
    %123 = vmatprep.subr.mxu0 0.0
    %124 = vmatpush1.msra.mxu0 %v116
    %125 = vmatprep.subr.mxu0 0.0
    %126 = vmatpush1.msra.mxu0 %v117
    %127 = vmatprep.subr.mxu0 0.0
    %128 = vmatpush1.msra.mxu0 %v118
    %129 = vmatprep.subr.mxu0 0.0
    %130 = vmatpush1.msra.mxu0 %v119
    %131 = vmatprep.subr.mxu0 0.0
    %132 = vmatpush1.msra.mxu0 0.0
    %133 = vmatprep.subr.mxu0 0.0
    %134 = vmatpush1.msra.mxu0 0.0
    %135 = vmatprep.subr.mxu0 0.0
    %136 = vmatpush1.msra.mxu0 0.0
    %137 = vmatprep.subr.mxu0 0.0
    %138 = vmatpush1.msra.mxu0 0.0
    %139 = vmatprep.subr.mxu0 0.0
    %140 = vmatpush1.msra.mxu0 0.0
    %141 = vmatprep.subr.mxu0 0.0
    %142 = vmatpush1.msra.mxu0 0.0
    %143 = vmatprep.subr.mxu0 0.0
    %144 = vmatpush1.msra.mxu0 0.0
    %145 = vmatprep.subr.mxu0 0.0
    %146 = vmatpush1.msra.mxu0 0.0
    %147 = vmatprep.subr.mxu0 0.0
    %148 = vmatpush1.msra.mxu0 0.0
    %149 = vmatprep.subr.mxu0 0.0
    %150 = vmatpush1.msra.mxu0 0.0
    %151 = vmatprep.subr.mxu0 0.0
    %152 = vmatpush1.msra.mxu0 0.0
    %153 = vmatprep.subr.mxu0 0.0
    %154 = vmatpush1.msra.mxu0 0.0
    %155 = vmatprep.subr.mxu0 0.0
    %156 = vmatpush1.msra.mxu0 0.0
    %157 = vmatprep.subr.mxu0 0.0
    %158 = vmatpush1.msra.mxu0 0.0
    %159 = vmatprep.subr.mxu0 0.0
    %160 = vmatpush1.msra.mxu0 0.0
    %161 = vmatprep.subr.mxu0 0.0
    %162 = vmatpush1.msra.mxu0 0.0
    %163 = vmatprep.subr.mxu0 0.0
    %164 = vmatpush1.msra.mxu0 0.0
    %165 = vmatprep.subr.mxu0 0.0
    %166 = vmatpush1.msra.mxu0 0.0
    %167 = vmatprep.subr.mxu0 0.0
    %168 = vmatpush1.msra.mxu0 0.0
    %169 = vmatprep.subr.mxu0 0.0
    %170 = vmatpush1.msra.mxu0 0.0
    %171 = vmatprep.subr.mxu0 0.0
    %172 = vmatpush1.msra.mxu0 0.0
    %173 = vmatprep.subr.mxu0 0.0
    %174 = vmatpush1.msra.mxu0 0.0
    %175 = vmatprep.subr.mxu0 0.0
    %176 = vmatpush1.msra.mxu0 0.0
    %177 = vmatprep.subr.mxu0 0.0
    %178 = vmatpush1.msra.mxu0 0.0
    %179 = vmatprep.subr.mxu0 0.0
    %180 = vmatpush1.msra.mxu0 0.0
    %181 = vmatprep.subr.mxu0 0.0
    %182 = vmatpush1.msra.mxu0 0.0
    %183 = vmatprep.subr.mxu0 0.0
    %184 = vmatpush1.msra.mxu0 0.0
    %185 = vmatprep.subr.mxu0 0.0
    %186 = vmatpush1.msra.mxu0 0.0
    %187 = vmatprep.mubr.f32.mxu0 0.0
    %188 = vmatmul.mubr.f32.gmra.mrb[0].mxu0 %v121
    %v189 = vpop.f32.mrb[0].mxu0
    %v190 = vadd.f32 0.0, %v189
    %v191 = vpop.f32.mrb[0].mxu0
    %192 = vdwg.mxu0
    %v193 = vld [vmem:[%s5] sm:$0x1]
    %v195 = vlaneseq
    %v196 = vshrl.u32 %v195, 7
    %v197 = vsub.s32 0, %v196
    %v198 = vrot.slane %v193, %v197
    %v200 = vmul.f32 %v113, %v198
    %vm201 = vcmask 254976
    %v202 = vsel %vm201, %v200, 0.0
    %203 = vadd.xlane.f32.xlu0 %v202
    %v204 = vpop.xlane.xlu0 %203
    %v205 = vld [vmem:[%s6] sm:$0xff]
    %v206 = vld [vmem:[%s6 + $0x8] sm:$0xff]
    %vm207 = vcmask 130048
    %v209 = vsel %vm207, %v190, 0
    %211 = vmatprep.subr.mxu0 0.0
    %212 = vmatpush1.msra.mxu0 %v205
    %213 = vmatprep.subr.mxu0 0.0
    %214 = vmatpush1.msra.mxu0 %v206
    %215 = vmatprep.subr.mxu0 0.0
    %216 = vmatpush1.msra.mxu0 0.0
    %217 = vmatprep.subr.mxu0 0.0
    %218 = vmatpush1.msra.mxu0 0.0
    %219 = vmatprep.subr.mxu0 0.0
    %220 = vmatpush1.msra.mxu0 0.0
    %221 = vmatprep.subr.mxu0 0.0
    %222 = vmatpush1.msra.mxu0 0.0
    %223 = vmatprep.subr.mxu0 0.0
    %224 = vmatpush1.msra.mxu0 0.0
    %225 = vmatprep.subr.mxu0 0.0
    %226 = vmatpush1.msra.mxu0 0.0
    %227 = vmatprep.subr.mxu0 0.0
    %228 = vmatpush1.msra.mxu0 0.0
    %229 = vmatprep.subr.mxu0 0.0
    %230 = vmatpush1.msra.mxu0 0.0
    %231 = vmatprep.subr.mxu0 0.0
    %232 = vmatpush1.msra.mxu0 0.0
    %233 = vmatprep.subr.mxu0 0.0
    %234 = vmatpush1.msra.mxu0 0.0
    %235 = vmatprep.subr.mxu0 0.0
    %236 = vmatpush1.msra.mxu0 0.0
    %237 = vmatprep.subr.mxu0 0.0
    %238 = vmatpush1.msra.mxu0 0.0
    %239 = vmatprep.subr.mxu0 0.0
    %240 = vmatpush1.msra.mxu0 0.0
    %241 = vmatprep.subr.mxu0 0.0
    %242 = vmatpush1.msra.mxu0 0.0
    %243 = vmatprep.subr.mxu0 0.0
    %244 = vmatpush1.msra.mxu0 0.0
    %245 = vmatprep.subr.mxu0 0.0
    %246 = vmatpush1.msra.mxu0 0.0
    %247 = vmatprep.subr.mxu0 0.0
    %248 = vmatpush1.msra.mxu0 0.0
    %249 = vmatprep.subr.mxu0 0.0
    %250 = vmatpush1.msra.mxu0 0.0
    %251 = vmatprep.subr.mxu0 0.0
    %252 = vmatpush1.msra.mxu0 0.0
    %253 = vmatprep.subr.mxu0 0.0
    %254 = vmatpush1.msra.mxu0 0.0
    %255 = vmatprep.subr.mxu0 0.0
    %256 = vmatpush1.msra.mxu0 0.0
    %257 = vmatprep.subr.mxu0 0.0
    %258 = vmatpush1.msra.mxu0 0.0
    %259 = vmatprep.subr.mxu0 0.0
    %260 = vmatpush1.msra.mxu0 0.0
    %261 = vmatprep.subr.mxu0 0.0
    %262 = vmatpush1.msra.mxu0 0.0
    %263 = vmatprep.subr.mxu0 0.0
    %264 = vmatpush1.msra.mxu0 0.0
    %265 = vmatprep.subr.mxu0 0.0
    %266 = vmatpush1.msra.mxu0 0.0
    %267 = vmatprep.subr.mxu0 0.0
    %268 = vmatpush1.msra.mxu0 0.0
    %269 = vmatprep.subr.mxu0 0.0
    %270 = vmatpush1.msra.mxu0 0.0
    %271 = vmatprep.subr.mxu0 0.0
    %272 = vmatpush1.msra.mxu0 0.0
    %273 = vmatprep.subr.mxu0 0.0
    %274 = vmatpush1.msra.mxu0 0.0
    %275 = vmatprep.mubr.f32.mxu0 0.0
    %276 = vmatmul.mubr.f32.gmra.mrb[0].mxu0 %v209
    %v277 = vpop.f32.mrb[0].mxu0
    %v278 = vadd.f32 0.0, %v277
    %v279 = vpop.f32.mrb[0].mxu0
    %280 = vdwg.mxu0
    %v281 = vld [vmem:[%s1] sm:$0x3]
    %v282 = vmul.f32 %v281, %v278
    %v283 = vld [vmem:[%s7] sm:$0xff]
    %v284 = vld [vmem:[%s7 + $0x8] sm:$0xff]
    %v285 = vld [vmem:[%s7 + $0x10] sm:$0xff]
    %v286 = vld [vmem:[%s7 + $0x18] sm:$0xff]
    %v287 = vld [vmem:[%s7 + $0x20] sm:$0xff]
    %v288 = vld [vmem:[%s7 + $0x28] sm:$0xff]
    %v289 = vld [vmem:[%s7 + $0x30] sm:$0xff]
    %v290 = vld [vmem:[%s7 + $0x38] sm:$0xff]
    %v291 = vld [vmem:[%s7 + $0x40] sm:$0xff]
    %v292 = vld [vmem:[%s7 + $0x48] sm:$0xff]
    %v293 = vld [vmem:[%s7 + $0x50] sm:$0xff]
    %v294 = vld [vmem:[%s7 + $0x58] sm:$0xff]
    %v295 = vld [vmem:[%s7 + $0x60] sm:$0xff]
    %v296 = vld [vmem:[%s7 + $0x68] sm:$0xff]
    %v297 = vld [vmem:[%s7 + $0x70] sm:$0xff]
    %v298 = vld [vmem:[%s7 + $0x78] sm:$0xff]
    %299 = vmatprep.subr.mxu0 0.0
    %300 = vmatpush1.msra.mxu0 %v283
    %301 = vmatprep.subr.mxu0 0.0
    %302 = vmatpush1.msra.mxu0 %v284
    %303 = vmatprep.subr.mxu0 0.0
    %304 = vmatpush1.msra.mxu0 %v285
    %305 = vmatprep.subr.mxu0 0.0
    %306 = vmatpush1.msra.mxu0 %v286
    %307 = vmatprep.subr.mxu0 0.0
    %308 = vmatpush1.msra.mxu0 %v287
    %309 = vmatprep.subr.mxu0 0.0
    %310 = vmatpush1.msra.mxu0 %v288
    %311 = vmatprep.subr.mxu0 0.0
    %312 = vmatpush1.msra.mxu0 %v289
    %313 = vmatprep.subr.mxu0 0.0
    %314 = vmatpush1.msra.mxu0 %v290
    %315 = vmatprep.subr.mxu0 0.0
    %316 = vmatpush1.msra.mxu0 %v291
    %317 = vmatprep.subr.mxu0 0.0
    %318 = vmatpush1.msra.mxu0 %v292
    %319 = vmatprep.subr.mxu0 0.0
    %320 = vmatpush1.msra.mxu0 %v293
    %321 = vmatprep.subr.mxu0 0.0
    %322 = vmatpush1.msra.mxu0 %v294
    %323 = vmatprep.subr.mxu0 0.0
    %324 = vmatpush1.msra.mxu0 %v295
    %325 = vmatprep.subr.mxu0 0.0
    %326 = vmatpush1.msra.mxu0 %v296
    %327 = vmatprep.subr.mxu0 0.0
    %328 = vmatpush1.msra.mxu0 %v297
    %329 = vmatprep.subr.mxu0 0.0
    %330 = vmatpush1.msra.mxu0 %v298
    %331 = vmatprep.subr.mxu0 0.0
    %332 = vmatpush1.msra.mxu0 0.0
    %333 = vmatprep.subr.mxu0 0.0
    %334 = vmatpush1.msra.mxu0 0.0
    %335 = vmatprep.subr.mxu0 0.0
    %336 = vmatpush1.msra.mxu0 0.0
    %337 = vmatprep.subr.mxu0 0.0
    %338 = vmatpush1.msra.mxu0 0.0
    %339 = vmatprep.subr.mxu0 0.0
    %340 = vmatpush1.msra.mxu0 0.0
    %341 = vmatprep.subr.mxu0 0.0
    %342 = vmatpush1.msra.mxu0 0.0
    %343 = vmatprep.subr.mxu0 0.0
    %344 = vmatpush1.msra.mxu0 0.0
    %345 = vmatprep.subr.mxu0 0.0
    %346 = vmatpush1.msra.mxu0 0.0
    %347 = vmatprep.subr.mxu0 0.0
    %348 = vmatpush1.msra.mxu0 0.0
    %349 = vmatprep.subr.mxu0 0.0
    %350 = vmatpush1.msra.mxu0 0.0
    %351 = vmatprep.subr.mxu0 0.0
    %352 = vmatpush1.msra.mxu0 0.0
    %353 = vmatprep.subr.mxu0 0.0
    %354 = vmatpush1.msra.mxu0 0.0
    %355 = vmatprep.subr.mxu0 0.0
    %356 = vmatpush1.msra.mxu0 0.0
    %357 = vmatprep.subr.mxu0 0.0
    %358 = vmatpush1.msra.mxu0 0.0
    %359 = vmatprep.subr.mxu0 0.0
    %360 = vmatpush1.msra.mxu0 0.0
    %361 = vmatprep.subr.mxu0 0.0
    %362 = vmatpush1.msra.mxu0 0.0
    %363 = vmatprep.mubr.f32.mxu0 0.0
    %364 = vmatmul.mubr.f32.gmra.mrb[0].mxu0 %v282
    %v365 = vpop.f32.mrb[0].mxu0
    %v366 = vadd.f32 %v204, %v365
    %v367 = vpop.f32.mrb[0].mxu0
    %368 = vdwg.mxu0
    %vm369 = vcmask 58368
    %370 = vst.msk [vmem:[#allocation2] sm:$0x3] %vm369, %v366
    // Predicated region
    $region34: #{tpu_custom_call.1} parent=1 // pred_check
      _
    $region35: #{tpu_custom_call.1} parent=1 // pred_check_branch
      %372 = sbr.rel (0) target = $region37
    $region36: #{tpu_custom_call.1} parent=1 // pred_region
      %s374 = ssub.s32 32, 32
      %375 = vsyncadd [#allocation3], %s374
      %s377 = sshll.u32 [#allocation2], 4
      %s378 = int_to_ptr.vmem [resolvable:$true] %s377
      %380 = dma.vmem_to_hbm [thread:$0]  %s378, 32, %s8, [#allocation3]
    $region37: #{tpu_custom_call.1} parent=1 // pred_fallthru
      _
    // Predicated region
    $region38: #{tpu_custom_call.1} parent=1 // pred_check
      _
    $region39: #{tpu_custom_call.1} parent=1 // pred_check_branch
      %382 = sbr.rel (0) target = $region41
    $region40: #{tpu_custom_call.1} parent=1 // pred_region
      %383 = dma.done [#allocation3], 32
    $region41: #{tpu_custom_call.1} parent=1 // pred_fallthru
      _
    %384 = vsyncpa [#allocation3], 1

</llo_original>
